<compile_context>
chip_gen: v6e
topology: v6e:2x2x1
jax: 0.10.0
libtpu: 0.0.40
codegen_flags: <defaults>
</compile_context>

<pallas_src>
import jax
import jax.numpy as jnp
from jax.experimental import pallas as pl
from jax.experimental.pallas import tpu as pltpu


def psi_kernel(x_ref, w1_ref, b1_ref, w2_ref, b2_ref, w3_ref, b3_ref, o_ref):
    # x_ref: (2R, TB)   w1: (R, 2R)  b1: (R, 1)
    #                   w2: (R, R)   b2: (R, 1)
    #                   w3: (R, 1)   b3: (1, 1)
    # o_ref: (1, TB)  -- lane-dense output slab
    x = x_ref[...]

    # Layer 1: Linear(2R -> R) + Tanh        (MXU, N = TB lanes)
    h1 = jnp.dot(w1_ref[...], x, preferred_element_type=jnp.float32) + b1_ref[...]
    h1 = jnp.tanh(h1)

    # Layer 2: Linear(R -> R) + Tanh         (MXU, N = TB lanes)
    h2 = jnp.dot(w2_ref[...], h1, preferred_element_type=jnp.float32) + b2_ref[...]
    h2 = jnp.tanh(h2)

    # Layer 3: Linear(R -> 1) + ReLU. R is tiny (5), so skip the MXU and do a
    # broadcast-multiply + sublane reduction (VPU/XLU slots are idle here).
    h3 = jnp.sum(w3_ref[...] * h2, axis=0, keepdims=True) + b3_ref[...]   # (1, TB)
    o_ref[...] = jnp.maximum(h3, 0.0).astype(o_ref.dtype)


def psi_computer(f_, params, *, tb=512):
    """f_ : (B, 2, R) float32. Returns Psi_ : (B, 1) float32."""
    w1, b1, w2, b2, w3, b3 = params
    B = f_.shape[0]
    R, R2 = w1.shape            # (out=R, in=2R)

    # nn.Flatten, then batch-on-lanes layout (features on sublanes).
    x_t = f_.reshape(B, R2).T                                   # (2R, B)

    # Pad batch to a multiple of the tile so arbitrary B works (pad sliced off
    # after the kernel; padded columns are pure throwaway compute on zeros).
    assert tb % 128 == 0, "batch tile must be lane-aligned (multiple of 128)"
    b_pad = -(-B // tb) * tb
    if b_pad != B:
        x_t = jnp.pad(x_t, ((0, 0), (0, b_pad - B)))

    grid = (b_pad // tb,)

    cost = pl.CostEstimate(
        flops=2 * b_pad * (R2 * R + R * R + R),
        transcendentals=2 * b_pad * R,
        bytes_accessed=b_pad * (R2 + 1) * 4
        + 4 * (w1.size + b1.size + w2.size + b2.size + w3.size + b3.size),
    )

    out = pl.pallas_call(
        psi_kernel,
        out_shape=jax.ShapeDtypeStruct((1, b_pad), jnp.float32),
        grid_spec=pltpu.PrefetchScalarGridSpec(
            num_scalar_prefetch=0,
            grid=grid,
            in_specs=[
                # x tile: full feature dim, tb batch columns on lanes.
                pl.BlockSpec((R2, tb), lambda i: (0, i)),
                pl.BlockSpec((R, R2), lambda i: (0, 0)),    # w1 (full)
                pl.BlockSpec((R, 1), lambda i: (0, 0)),     # b1
                pl.BlockSpec((R, R), lambda i: (0, 0)),     # w2 (full)
                pl.BlockSpec((R, 1), lambda i: (0, 0)),     # b2
                pl.BlockSpec((R, 1), lambda i: (0, 0)),     # w3
                pl.BlockSpec((1, 1), lambda i: (0, 0)),     # b3
            ],
            # Lane-dense output slab: (1, tb) unmasked stores.
            out_specs=pl.BlockSpec((1, tb), lambda i: (0, i)),
        ),
        compiler_params=pltpu.CompilerParams(
            dimension_semantics=("parallel",),
            vmem_limit_bytes=32 << 20,   # pinned; trivial footprint, v7x-safe
        ),
        cost_estimate=cost,
    )(x_t, w1, b1, w2, b2, w3, b3)

    return out[0, :B].reshape(B, 1)


def init_params(key, R=5):
    """Deterministic init mimicking PyTorch nn.Linear defaults
    (uniform(-1/sqrt(fan_in), 1/sqrt(fan_in))). Weights stored (out, in),
    biases stored (out, 1)."""
    k1, k2, k3, k4, k5, k6 = jax.random.split(key, 6)

    def uinit(k, shape, fan_in):
        bound = 1.0 / jnp.sqrt(jnp.float32(fan_in))
        return jax.random.uniform(k, shape, jnp.float32, -bound, bound)

    w1 = uinit(k1, (R, 2 * R), 2 * R)
    b1 = uinit(k2, (R, 1), 2 * R)
    w2 = uinit(k3, (R, R), R)
    b2 = uinit(k4, (R, 1), R)
    w3 = uinit(k5, (R, 1), R)
    b3 = uinit(k6, (1, 1), R)
    return (w1, b1, w2, b2, w3, b3)


def psi_reference(f_, params):
    w1, b1, w2, b2, w3, b3 = params
    x = f_.reshape(f_.shape[0], -1)
    h = jnp.tanh(x @ w1.T + b1.T)
    h = jnp.tanh(h @ w2.T + b2.T)
    return jnp.maximum(h @ w3 + b3.T, 0.0)


if __name__ == "__main__":
    R = 5
    B = 8
    key = jax.random.PRNGKey(0)
    k_params, k_input = jax.random.split(key)

    params = init_params(k_params, R=R)
    f_ = jax.random.normal(k_input, (B, 2, R), dtype=jnp.float32)

    psi = psi_computer(f_, params, tb=512)
    psi = jax.block_until_ready(psi)

    ref = psi_reference(f_, params)
    assert psi.shape == (B, 1)
    assert jnp.allclose(psi, ref, atol=1e-5, rtol=1e-5), "mismatch vs reference"

    print("KERNEL_OK")
</pallas_src>

<mosaic_0001>
module attributes {stable_mosaic.version = 11 : i64} {
  func.func @psi_kernel(%arg0: i32, %arg1: memref<10x512xf32, #tpu.memory_space<vmem>>, %arg2: memref<5x10xf32, #tpu.memory_space<vmem>>, %arg3: memref<5x1xf32, #tpu.memory_space<vmem>>, %arg4: memref<5x5xf32, #tpu.memory_space<vmem>>, %arg5: memref<5x1xf32, #tpu.memory_space<vmem>>, %arg6: memref<5x1xf32, #tpu.memory_space<vmem>>, %arg7: memref<1x1xf32, #tpu.memory_space<vmem>>, %arg8: memref<1x512xf32, #tpu.memory_space<vmem>>) attributes {dimension_semantics = [#tpu.dimension_semantics<parallel>], iteration_bounds = array<i64: 1>, scalar_prefetch = 0 : i64, scratch_operands = 0 : i64, tpu.core_type = #tpu.core_type<tc>, window_params = [{transform_indices = @transform_0, window_bounds = array<i64: 10, 512>}, {pipeline_mode = #tpu.pipeline_mode<synchronous>, transform_indices = @transform_1, window_bounds = array<i64: 5, 10>}, {pipeline_mode = #tpu.pipeline_mode<synchronous>, transform_indices = @transform_2, window_bounds = array<i64: 5, 1>}, {pipeline_mode = #tpu.pipeline_mode<synchronous>, transform_indices = @transform_3, window_bounds = array<i64: 5, 5>}, {pipeline_mode = #tpu.pipeline_mode<synchronous>, transform_indices = @transform_4, window_bounds = array<i64: 5, 1>}, {pipeline_mode = #tpu.pipeline_mode<synchronous>, transform_indices = @transform_5, window_bounds = array<i64: 5, 1>}, {pipeline_mode = #tpu.pipeline_mode<synchronous>, transform_indices = @transform_6, window_bounds = array<i64: 1, 1>}, {transform_indices = @transform_7, window_bounds = array<i64: 1, 512>}]} {
    %c0 = arith.constant 0 : index
    %c0_0 = arith.constant 0 : index
    %0 = vector.load %arg1[%c0, %c0_0] : memref<10x512xf32, #tpu.memory_space<vmem>>, vector<10x512xf32>
    %c0_1 = arith.constant 0 : index
    %c0_2 = arith.constant 0 : index
    %1 = vector.load %arg2[%c0_1, %c0_2] : memref<5x10xf32, #tpu.memory_space<vmem>>, vector<5x10xf32>
    %cst = arith.constant dense<0.000000e+00> : vector<5x512xf32>
    %2 = tpu.matmul %1, %0, %cst {dimension_numbers = #tpu.dot_dimension_numbers<[1], [0], [0], [1], [0, 0, 1, 1], [], []>} : vector<5x10xf32>, vector<10x512xf32>, vector<5x512xf32> -> vector<5x512xf32>
    %c0_3 = arith.constant 0 : index
    %c0_4 = arith.constant 0 : index
    %3 = vector.load %arg3[%c0_3, %c0_4] : memref<5x1xf32, #tpu.memory_space<vmem>>, vector<5x1xf32>
    %4 = vector.broadcast %3 : vector<5x1xf32> to vector<5x512xf32>
    %5 = arith.addf %2, %4 : vector<5x512xf32>
    %6 = math.tanh %5 : vector<5x512xf32>
    %c0_5 = arith.constant 0 : index
    %c0_6 = arith.constant 0 : index
    %7 = vector.load %arg4[%c0_5, %c0_6] : memref<5x5xf32, #tpu.memory_space<vmem>>, vector<5x5xf32>
    %cst_7 = arith.constant dense<0.000000e+00> : vector<5x512xf32>
    %8 = tpu.matmul %7, %6, %cst_7 {dimension_numbers = #tpu.dot_dimension_numbers<[1], [0], [0], [1], [0, 0, 1, 1], [], []>} : vector<5x5xf32>, vector<5x512xf32>, vector<5x512xf32> -> vector<5x512xf32>
    %c0_8 = arith.constant 0 : index
    %c0_9 = arith.constant 0 : index
    %9 = vector.load %arg5[%c0_8, %c0_9] : memref<5x1xf32, #tpu.memory_space<vmem>>, vector<5x1xf32>
    %10 = vector.broadcast %9 : vector<5x1xf32> to vector<5x512xf32>
    %11 = arith.addf %8, %10 : vector<5x512xf32>
    %12 = math.tanh %11 : vector<5x512xf32>
    %c0_10 = arith.constant 0 : index
    %c0_11 = arith.constant 0 : index
    %13 = vector.load %arg6[%c0_10, %c0_11] : memref<5x1xf32, #tpu.memory_space<vmem>>, vector<5x1xf32>
    %14 = vector.broadcast %13 : vector<5x1xf32> to vector<5x512xf32>
    %15 = arith.mulf %14, %12 : vector<5x512xf32>
    %cst_12 = arith.constant dense<0.000000e+00> : vector<512xf32>
    %16 = vector.multi_reduction <add>, %15, %cst_12 [0] : vector<5x512xf32> to vector<512xf32>
    %17 = vector.shape_cast %16 : vector<512xf32> to vector<1x512xf32>
    %c0_13 = arith.constant 0 : index
    %c0_14 = arith.constant 0 : index
    %18 = vector.load %arg7[%c0_13, %c0_14] : memref<1x1xf32, #tpu.memory_space<vmem>>, vector<1x1xf32>
    %19 = vector.broadcast %18 : vector<1x1xf32> to vector<1x512xf32>
    %20 = arith.addf %17, %19 : vector<1x512xf32>
    %cst_15 = arith.constant 0.000000e+00 : f32
    %21 = vector.broadcast %cst_15 : f32 to vector<1x512xf32>
    %22 = arith.maximumf %20, %21 : vector<1x512xf32>
    %c0_16 = arith.constant 0 : index
    %c0_17 = arith.constant 0 : index
    %23 = vector.load %arg8[%c0_16, %c0_17] : memref<1x512xf32, #tpu.memory_space<vmem>>, vector<1x512xf32>
    tpu.vector_store %arg8[%c0_16, %c0_17], %22 {strides = array<i32>} : memref<1x512xf32, #tpu.memory_space<vmem>>, vector<1x512xf32>,
    return
  }
  func.func @transform_0(%arg0: i32) -> (i32, i32) {
    %c0_i32 = arith.constant 0 : i32
    %c0_i32_0 = arith.constant 0 : i32
    return %c0_i32, %arg0 : i32, i32
  }
  func.func @transform_1(%arg0: i32) -> (i32, i32) {
    %c0_i32 = arith.constant 0 : i32
    %c0_i32_0 = arith.constant 0 : i32
    %c0_i32_1 = arith.constant 0 : i32
    return %c0_i32, %c0_i32_0 : i32, i32
  }
  func.func @transform_2(%arg0: i32) -> (i32, i32) {
    %c0_i32 = arith.constant 0 : i32
    %c0_i32_0 = arith.constant 0 : i32
    %c0_i32_1 = arith.constant 0 : i32
    return %c0_i32, %c0_i32_0 : i32, i32
  }
  func.func @transform_3(%arg0: i32) -> (i32, i32) {
    %c0_i32 = arith.constant 0 : i32
    %c0_i32_0 = arith.constant 0 : i32
    %c0_i32_1 = arith.constant 0 : i32
    return %c0_i32, %c0_i32_0 : i32, i32
  }
  func.func @transform_4(%arg0: i32) -> (i32, i32) {
    %c0_i32 = arith.constant 0 : i32
    %c0_i32_0 = arith.constant 0 : i32
    %c0_i32_1 = arith.constant 0 : i32
    return %c0_i32, %c0_i32_0 : i32, i32
  }
  func.func @transform_5(%arg0: i32) -> (i32, i32) {
    %c0_i32 = arith.constant 0 : i32
    %c0_i32_0 = arith.constant 0 : i32
    %c0_i32_1 = arith.constant 0 : i32
    return %c0_i32, %c0_i32_0 : i32, i32
  }
  func.func @transform_6(%arg0: i32) -> (i32, i32) {
    %c0_i32 = arith.constant 0 : i32
    %c0_i32_0 = arith.constant 0 : i32
    %c0_i32_1 = arith.constant 0 : i32
    return %c0_i32, %c0_i32_0 : i32, i32
  }
  func.func @transform_7(%arg0: i32) -> (i32, i32) {
    %c0_i32 = arith.constant 0 : i32
    %c0_i32_0 = arith.constant 0 : i32
    return %c0_i32, %arg0 : i32, i32
  }
}

</mosaic_0001>

<llo_original>
// kernel: tpu_custom_call.1
$region0: #{tpu_custom_call.1}
  #allocation0 [shape = 'u32[]', space=smem, size = 0x4, offset = 0x4, fixed_abs, tag = 'smem constant byte address 0x4 - core index']
  #allocation1 [shape = 'u32[144,128]{1,0:T(1,128)}', space=vmem, size = 0x12000, scoped, tag = 'internal scratch']
  #allocation2 [shape = 'f32[1,1]{1,0:T(1,128)S(1)}', space=vmem, size = 0x200, scoped, tag = 'scoped memory for tpu_custom_call.1']
  %s0 = inlined_call_operand.hbm [shape: f32[10,512], index: 0, kind: input, shape index: {}]
  %s1 = inlined_call_operand.vmem [shape: f32[5,10], index: 1, kind: input, shape index: {}]
  %s2 = inlined_call_operand.vmem [shape: f32[5,1], index: 2, kind: input, shape index: {}]
  %s3 = inlined_call_operand.vmem [shape: f32[5,5], index: 3, kind: input, shape index: {}]
  %s4 = inlined_call_operand.vmem [shape: f32[5,1], index: 4, kind: input, shape index: {}]
  %s5 = inlined_call_operand.vmem [shape: f32[5,1], index: 5, kind: input, shape index: {}]
  %s6 = inlined_call_operand.<no memory space> [shape: f32[1,1], index: 6, kind: input, shape index: {}]
  %s7 = inlined_call_operand.hbm [shape: f32[1,512], index: 7, kind: output, shape index: {}]
  %s8 = sld [smem:[#allocation0]]
  $region42: #{tpu_custom_call.1} parent=0
    _
  %s10 = ssub.s32 1, %s8
  %s11 = scalar_select 0, %s10, %s8
  %v12 = vstv %s6
  %13 = vst [vmem:[#allocation2] sm:$0x1] %v12
  $region1: #{tpu_custom_call.1} parent=0
    #allocation3 [shape = 'u8[32768]{0}', space=vmem, size = 0x8000, scoped, tag = 'input window, operand 0, single buffered']
    #allocation4 [shape = 's32[1]{0}', space=sflag, size = 0x4, scoped, tag = 'scoped memory for tpu_custom_call.1']
    #allocation5 [shape = 's32[1]{0}', space=sflag, size = 0x4, scoped, tag = 'scoped memory for tpu_custom_call.1']
    #allocation6 [shape = 'u8[2048]{0}', space=vmem, size = 0x800, scoped, tag = 'output window, operand 0, single buffered']
    %14 = vsyncpa [#allocation4], 0
    %15 = vsyncpa [#allocation5], 0
    // Predicated region
    $region2: #{tpu_custom_call.1} parent=1 // pred_check
      _
    $region3: #{tpu_custom_call.1} parent=1 // pred_check_branch
      %17 = sbr.rel (0) target = $region5
    $region4: #{tpu_custom_call.1} parent=1 // pred_region
      %s19 = ssub.s32 1024, 1024
      %20 = vsyncadd [#allocation4], %s19
      %s21 = sshll.u32 [#allocation3], 4
      %s22 = int_to_ptr.vmem [resolvable:$true] %s21
      %27 = dma.hbm_to_vmem [thread:$0]  %s0, 1024, %s22, [#allocation4], 512, 512, 32
    $region5: #{tpu_custom_call.1} parent=1 // pred_fallthru
      _
    // Predicated region
    $region6: #{tpu_custom_call.1} parent=1 // pred_check
      _
    $region7: #{tpu_custom_call.1} parent=1 // pred_check_branch
      %29 = sbr.rel (0) target = $region9
    $region8: #{tpu_custom_call.1} parent=1 // pred_region
      _
    $region9: #{tpu_custom_call.1} parent=1 // pred_fallthru
      _
    // Predicated region
    $region10: #{tpu_custom_call.1} parent=1 // pred_check
      _
    $region11: #{tpu_custom_call.1} parent=1 // pred_check_branch
      %31 = sbr.rel (0) target = $region13
    $region12: #{tpu_custom_call.1} parent=1 // pred_region
      _
    $region13: #{tpu_custom_call.1} parent=1 // pred_fallthru
      _
    // Predicated region
    $region14: #{tpu_custom_call.1} parent=1 // pred_check
      _
    $region15: #{tpu_custom_call.1} parent=1 // pred_check_branch
      %33 = sbr.rel (0) target = $region17
    $region16: #{tpu_custom_call.1} parent=1 // pred_region
      _
    $region17: #{tpu_custom_call.1} parent=1 // pred_fallthru
      _
    // Predicated region
    $region18: #{tpu_custom_call.1} parent=1 // pred_check
      _
    $region19: #{tpu_custom_call.1} parent=1 // pred_check_branch
      %35 = sbr.rel (0) target = $region21
    $region20: #{tpu_custom_call.1} parent=1 // pred_region
      _
    $region21: #{tpu_custom_call.1} parent=1 // pred_fallthru
      _
    // Predicated region
    $region22: #{tpu_custom_call.1} parent=1 // pred_check
      _
    $region23: #{tpu_custom_call.1} parent=1 // pred_check_branch
      %37 = sbr.rel (0) target = $region25
    $region24: #{tpu_custom_call.1} parent=1 // pred_region
      _
    $region25: #{tpu_custom_call.1} parent=1 // pred_fallthru
      _
    // Predicated region
    $region26: #{tpu_custom_call.1} parent=1 // pred_check
      _
    $region27: #{tpu_custom_call.1} parent=1 // pred_check_branch
      %39 = sbr.rel (0) target = $region29
    $region28: #{tpu_custom_call.1} parent=1 // pred_region
      _
    $region29: #{tpu_custom_call.1} parent=1 // pred_fallthru
      _
    // Predicated region
    $region30: #{tpu_custom_call.1} parent=1 // pred_check
      _
    $region31: #{tpu_custom_call.1} parent=1 // pred_check_branch
      %41 = sbr.rel (0) target = $region33
    $region32: #{tpu_custom_call.1} parent=1 // pred_region
      %42 = dma.done [#allocation4], 1024
    $region33: #{tpu_custom_call.1} parent=1 // pred_fallthru
      _
    %v43 = vld [vmem:[#allocation3] sm:$0xff]
    %v44 = vld [vmem:[#allocation3 + $0x8] sm:$0xff]
    %v45 = vld [vmem:[#allocation3 + $0x10] sm:$0xff]
    %v46 = vld [vmem:[#allocation3 + $0x18] sm:$0xff]
    %v47 = vld [vmem:[#allocation3 + $0x20] sm:$0x3]
    %v48 = vld [vmem:[#allocation3 + $0x28] sm:$0x3]
    %v49 = vld [vmem:[#allocation3 + $0x30] sm:$0x3]
    %v50 = vld [vmem:[#allocation3 + $0x38] sm:$0x3]
    %v51 = vld [vmem:[%s1] sm:$0x1f]
    %v52 = vld [vmem:[%s2] sm:$0x1f]
    %54 = vset.pattern.permute.xlu0 0
    %55 = vperm.xlu0 %54, %v52
    %v56 = vpop.permute.xlu0 %55
    %vm58 = vcmask 80896
    %v60 = vsel %vm58, %v51, 0
    %vm62 = vcmask 1041408
    %v64 = vsel %vm62, %v47, 0
    %v67 = vsel %vm62, %v48, 0
    %v70 = vsel %vm62, %v49, 0
    %v73 = vsel %vm62, %v50, 0
    %75 = vmatprep.subr.mxu0 0.0
    %76 = vmatpush1.msra.mxu0 0.0
    %77 = vmatprep.subr.mxu0 0.0
    %78 = vmatpush1.msra.mxu0 0.0
    %79 = vmatprep.subr.mxu0 0.0
    %80 = vmatpush1.msra.mxu0 0.0
    %81 = vmatprep.subr.mxu0 0.0
    %82 = vmatpush1.msra.mxu0 0.0
    %83 = vmatprep.subr.mxu0 0.0
    %84 = vmatpush1.msra.mxu0 0.0
    %85 = vmatprep.subr.mxu0 0.0
    %86 = vmatpush1.msra.mxu0 0.0
    %87 = vmatprep.subr.mxu0 0.0
    %88 = vmatpush1.msra.mxu0 0.0
    %89 = vmatprep.subr.mxu0 0.0
    %90 = vmatpush1.msra.mxu0 0.0
    %91 = vmatprep.subr.mxu0 0.0
    %92 = vmatpush1.msra.mxu0 0.0
    %93 = vmatprep.subr.mxu0 0.0
    %94 = vmatpush1.msra.mxu0 0.0
    %95 = vmatprep.subr.mxu0 0.0
    %96 = vmatpush1.msra.mxu0 0.0
    %97 = vmatprep.subr.mxu0 0.0
    %98 = vmatpush1.msra.mxu0 0.0
    %99 = vmatprep.subr.mxu0 0.0
    %100 = vmatpush1.msra.mxu0 0.0
    %101 = vmatprep.subr.mxu0 0.0
    %102 = vmatpush1.msra.mxu0 0.0
    %103 = vmatprep.subr.mxu0 %v67
    %104 = vmatpush1.msra.mxu0 %v64
    %105 = vmatprep.subr.mxu0 %v44
    %106 = vmatpush1.msra.mxu0 %v43
    %107 = vmatprep.subr.mxu0 0.0
    %108 = vmatpush2.msra.mxu0 0.0
    %109 = vmatprep.subr.mxu0 0.0
    %110 = vmatpush2.msra.mxu0 0.0
    %111 = vmatprep.subr.mxu0 0.0
    %112 = vmatpush2.msra.mxu0 0.0
    %113 = vmatprep.subr.mxu0 0.0
    %114 = vmatpush2.msra.mxu0 0.0
    %115 = vmatprep.subr.mxu0 0.0
    %116 = vmatpush2.msra.mxu0 0.0
    %117 = vmatprep.subr.mxu0 0.0
    %118 = vmatpush2.msra.mxu0 0.0
    %119 = vmatprep.subr.mxu0 0.0
    %120 = vmatpush2.msra.mxu0 0.0
    %121 = vmatprep.subr.mxu0 0.0
    %122 = vmatpush2.msra.mxu0 0.0
    %123 = vmatprep.subr.mxu0 0.0
    %124 = vmatpush2.msra.mxu0 0.0
    %125 = vmatprep.subr.mxu0 0.0
    %126 = vmatpush2.msra.mxu0 0.0
    %127 = vmatprep.subr.mxu0 0.0
    %128 = vmatpush2.msra.mxu0 0.0
    %129 = vmatprep.subr.mxu0 0.0
    %130 = vmatpush2.msra.mxu0 0.0
    %131 = vmatprep.subr.mxu0 0.0
    %132 = vmatpush2.msra.mxu0 0.0
    %133 = vmatprep.subr.mxu0 0.0
    %134 = vmatpush2.msra.mxu0 0.0
    %135 = vmatprep.subr.mxu0 0.0
    %136 = vmatpush2.msra.mxu0 0.0
    %137 = vmatprep.subr.mxu0 0.0
    %138 = vmatpush2.msra.mxu0 0.0
    %139 = vmatprep.mubr.f32.mxu0 0.0
    %140 = vmatmul.mubr.f32.gmra.mxu0 %v60
    %v141 = vpop.f32.mrf.mxu0
    %v142 = vadd.f32 %v56, %v141
    %v143 = vpop.f32.mrf.mxu0
    %v144 = vadd.f32 %v56, %v143
    %145 = vdwg.mxu0
    %146 = vmatprep.subr.mxu0 0.0
    %147 = vmatpush1.msra.mxu0 0.0
    %148 = vmatprep.subr.mxu0 0.0
    %149 = vmatpush1.msra.mxu0 0.0
    %150 = vmatprep.subr.mxu0 0.0
    %151 = vmatpush1.msra.mxu0 0.0
    %152 = vmatprep.subr.mxu0 0.0
    %153 = vmatpush1.msra.mxu0 0.0
    %154 = vmatprep.subr.mxu0 0.0
    %155 = vmatpush1.msra.mxu0 0.0
    %156 = vmatprep.subr.mxu0 0.0
    %157 = vmatpush1.msra.mxu0 0.0
    %158 = vmatprep.subr.mxu0 0.0
    %159 = vmatpush1.msra.mxu0 0.0
    %160 = vmatprep.subr.mxu0 0.0
    %161 = vmatpush1.msra.mxu0 0.0
    %162 = vmatprep.subr.mxu0 0.0
    %163 = vmatpush1.msra.mxu0 0.0
    %164 = vmatprep.subr.mxu0 0.0
    %165 = vmatpush1.msra.mxu0 0.0
    %166 = vmatprep.subr.mxu0 0.0
    %167 = vmatpush1.msra.mxu0 0.0
    %168 = vmatprep.subr.mxu0 0.0
    %169 = vmatpush1.msra.mxu0 0.0
    %170 = vmatprep.subr.mxu0 0.0
    %171 = vmatpush1.msra.mxu0 0.0
    %172 = vmatprep.subr.mxu0 0.0
    %173 = vmatpush1.msra.mxu0 0.0
    %174 = vmatprep.subr.mxu0 %v73
    %175 = vmatpush1.msra.mxu0 %v70
    %176 = vmatprep.subr.mxu0 %v46
    %177 = vmatpush1.msra.mxu0 %v45
    %178 = vmatprep.subr.mxu0 0.0
    %179 = vmatpush2.msra.mxu0 0.0
    %180 = vmatprep.subr.mxu0 0.0
    %181 = vmatpush2.msra.mxu0 0.0
    %182 = vmatprep.subr.mxu0 0.0
    %183 = vmatpush2.msra.mxu0 0.0
    %184 = vmatprep.subr.mxu0 0.0
    %185 = vmatpush2.msra.mxu0 0.0
    %186 = vmatprep.subr.mxu0 0.0
    %187 = vmatpush2.msra.mxu0 0.0
    %188 = vmatprep.subr.mxu0 0.0
    %189 = vmatpush2.msra.mxu0 0.0
    %190 = vmatprep.subr.mxu0 0.0
    %191 = vmatpush2.msra.mxu0 0.0
    %192 = vmatprep.subr.mxu0 0.0
    %193 = vmatpush2.msra.mxu0 0.0
    %194 = vmatprep.subr.mxu0 0.0
    %195 = vmatpush2.msra.mxu0 0.0
    %196 = vmatprep.subr.mxu0 0.0
    %197 = vmatpush2.msra.mxu0 0.0
    %198 = vmatprep.subr.mxu0 0.0
    %199 = vmatpush2.msra.mxu0 0.0
    %200 = vmatprep.subr.mxu0 0.0
    %201 = vmatpush2.msra.mxu0 0.0
    %202 = vmatprep.subr.mxu0 0.0
    %203 = vmatpush2.msra.mxu0 0.0
    %204 = vmatprep.subr.mxu0 0.0
    %205 = vmatpush2.msra.mxu0 0.0
    %206 = vmatprep.subr.mxu0 0.0
    %207 = vmatpush2.msra.mxu0 0.0
    %208 = vmatprep.subr.mxu0 0.0
    %209 = vmatpush2.msra.mxu0 0.0
    %210 = vmatprep.mubr.f32.mxu0 0.0
    %211 = vmatmul.mubr.f32.gmra.mxu0 %v60
    %v212 = vpop.f32.mrf.mxu0
    %v213 = vadd.f32 %v56, %v212
    %v214 = vpop.f32.mrf.mxu0
    %v215 = vadd.f32 %v56, %v214
    %216 = vdwg.mxu0
    %v217 = vtanh.pop %v142
    %v218 = vtanh.pop %v144
    %v219 = vtanh.pop %v213
    %v220 = vtanh.pop %v215
    %v221 = vld [vmem:[%s3] sm:$0x1f]
    %v222 = vld [vmem:[%s4] sm:$0x1f]
    %224 = vset.pattern.permute.xlu0 0
    %225 = vperm.xlu0 %224, %v222
    %v226 = vpop.permute.xlu0 %225
    %vm228 = vcmask 39936
    %v230 = vsel %vm228, %v221, 0
    %vm232 = vcmask 1044480
    %v234 = vsel %vm232, %v217, 0
    %v237 = vsel %vm232, %v218, 0
    %v240 = vsel %vm232, %v219, 0
    %v243 = vsel %vm232, %v220, 0
    %245 = vmatprep.subr.mxu0 0.0
    %246 = vmatpush1.msra.mxu0 0.0
    %247 = vmatprep.subr.mxu0 0.0
    %248 = vmatpush1.msra.mxu0 0.0
    %249 = vmatprep.subr.mxu0 0.0
    %250 = vmatpush1.msra.mxu0 0.0
    %251 = vmatprep.subr.mxu0 0.0
    %252 = vmatpush1.msra.mxu0 0.0
    %253 = vmatprep.subr.mxu0 0.0
    %254 = vmatpush1.msra.mxu0 0.0
    %255 = vmatprep.subr.mxu0 0.0
    %256 = vmatpush1.msra.mxu0 0.0
    %257 = vmatprep.subr.mxu0 0.0
    %258 = vmatpush1.msra.mxu0 0.0
    %259 = vmatprep.subr.mxu0 0.0
    %260 = vmatpush1.msra.mxu0 0.0
    %261 = vmatprep.subr.mxu0 0.0
    %262 = vmatpush1.msra.mxu0 0.0
    %263 = vmatprep.subr.mxu0 0.0
    %264 = vmatpush1.msra.mxu0 0.0
    %265 = vmatprep.subr.mxu0 0.0
    %266 = vmatpush1.msra.mxu0 0.0
    %267 = vmatprep.subr.mxu0 0.0
    %268 = vmatpush1.msra.mxu0 0.0
    %269 = vmatprep.subr.mxu0 0.0
    %270 = vmatpush1.msra.mxu0 0.0
    %271 = vmatprep.subr.mxu0 0.0
    %272 = vmatpush1.msra.mxu0 0.0
    %273 = vmatprep.subr.mxu0 0.0
    %274 = vmatpush1.msra.mxu0 0.0
    %275 = vmatprep.subr.mxu0 %v237
    %276 = vmatpush1.msra.mxu0 %v234
    %277 = vmatprep.subr.mxu0 0.0
    %278 = vmatpush2.msra.mxu0 0.0
    %279 = vmatprep.subr.mxu0 0.0
    %280 = vmatpush2.msra.mxu0 0.0
    %281 = vmatprep.subr.mxu0 0.0
    %282 = vmatpush2.msra.mxu0 0.0
    %283 = vmatprep.subr.mxu0 0.0
    %284 = vmatpush2.msra.mxu0 0.0
    %285 = vmatprep.subr.mxu0 0.0
    %286 = vmatpush2.msra.mxu0 0.0
    %287 = vmatprep.subr.mxu0 0.0
    %288 = vmatpush2.msra.mxu0 0.0
    %289 = vmatprep.subr.mxu0 0.0
    %290 = vmatpush2.msra.mxu0 0.0
    %291 = vmatprep.subr.mxu0 0.0
    %292 = vmatpush2.msra.mxu0 0.0
    %293 = vmatprep.subr.mxu0 0.0
    %294 = vmatpush2.msra.mxu0 0.0
    %295 = vmatprep.subr.mxu0 0.0
    %296 = vmatpush2.msra.mxu0 0.0
    %297 = vmatprep.subr.mxu0 0.0
    %298 = vmatpush2.msra.mxu0 0.0
    %299 = vmatprep.subr.mxu0 0.0
    %300 = vmatpush2.msra.mxu0 0.0
    %301 = vmatprep.subr.mxu0 0.0
    %302 = vmatpush2.msra.mxu0 0.0
    %303 = vmatprep.subr.mxu0 0.0
    %304 = vmatpush2.msra.mxu0 0.0
    %305 = vmatprep.subr.mxu0 0.0
    %306 = vmatpush2.msra.mxu0 0.0
    %307 = vmatprep.subr.mxu0 0.0
    %308 = vmatpush2.msra.mxu0 0.0
    %309 = vmatprep.mubr.f32.mxu0 0.0
    %310 = vmatmul.mubr.f32.gmra.mxu0 %v230
    %v311 = vpop.f32.mrf.mxu0
    %v312 = vadd.f32 %v226, %v311
    %v313 = vpop.f32.mrf.mxu0
    %v314 = vadd.f32 %v226, %v313
    %315 = vdwg.mxu0
    %316 = vmatprep.subr.mxu0 0.0
    %317 = vmatpush1.msra.mxu0 0.0
    %318 = vmatprep.subr.mxu0 0.0
    %319 = vmatpush1.msra.mxu0 0.0
    %320 = vmatprep.subr.mxu0 0.0
    %321 = vmatpush1.msra.mxu0 0.0
    %322 = vmatprep.subr.mxu0 0.0
    %323 = vmatpush1.msra.mxu0 0.0
    %324 = vmatprep.subr.mxu0 0.0
    %325 = vmatpush1.msra.mxu0 0.0
    %326 = vmatprep.subr.mxu0 0.0
    %327 = vmatpush1.msra.mxu0 0.0
    %328 = vmatprep.subr.mxu0 0.0
    %329 = vmatpush1.msra.mxu0 0.0
    %330 = vmatprep.subr.mxu0 0.0
    %331 = vmatpush1.msra.mxu0 0.0
    %332 = vmatprep.subr.mxu0 0.0
    %333 = vmatpush1.msra.mxu0 0.0
    %334 = vmatprep.subr.mxu0 0.0
    %335 = vmatpush1.msra.mxu0 0.0
    %336 = vmatprep.subr.mxu0 0.0
    %337 = vmatpush1.msra.mxu0 0.0
    %338 = vmatprep.subr.mxu0 0.0
    %339 = vmatpush1.msra.mxu0 0.0
    %340 = vmatprep.subr.mxu0 0.0
    %341 = vmatpush1.msra.mxu0 0.0
    %342 = vmatprep.subr.mxu0 0.0
    %343 = vmatpush1.msra.mxu0 0.0
    %344 = vmatprep.subr.mxu0 0.0
    %345 = vmatpush1.msra.mxu0 0.0
    %346 = vmatprep.subr.mxu0 %v243
    %347 = vmatpush1.msra.mxu0 %v240
    %348 = vmatprep.subr.mxu0 0.0
    %349 = vmatpush2.msra.mxu0 0.0
    %350 = vmatprep.subr.mxu0 0.0
    %351 = vmatpush2.msra.mxu0 0.0
    %352 = vmatprep.subr.mxu0 0.0
    %353 = vmatpush2.msra.mxu0 0.0
    %354 = vmatprep.subr.mxu0 0.0
    %355 = vmatpush2.msra.mxu0 0.0
    %356 = vmatprep.subr.mxu0 0.0
    %357 = vmatpush2.msra.mxu0 0.0
    %358 = vmatprep.subr.mxu0 0.0
    %359 = vmatpush2.msra.mxu0 0.0
    %360 = vmatprep.subr.mxu0 0.0
    %361 = vmatpush2.msra.mxu0 0.0
    %362 = vmatprep.subr.mxu0 0.0
    %363 = vmatpush2.msra.mxu0 0.0
    %364 = vmatprep.subr.mxu0 0.0
    %365 = vmatpush2.msra.mxu0 0.0
    %366 = vmatprep.subr.mxu0 0.0
    %367 = vmatpush2.msra.mxu0 0.0
    %368 = vmatprep.subr.mxu0 0.0
    %369 = vmatpush2.msra.mxu0 0.0
    %370 = vmatprep.subr.mxu0 0.0
    %371 = vmatpush2.msra.mxu0 0.0
    %372 = vmatprep.subr.mxu0 0.0
    %373 = vmatpush2.msra.mxu0 0.0
    %374 = vmatprep.subr.mxu0 0.0
    %375 = vmatpush2.msra.mxu0 0.0
    %376 = vmatprep.subr.mxu0 0.0
    %377 = vmatpush2.msra.mxu0 0.0
    %378 = vmatprep.subr.mxu0 0.0
    %379 = vmatpush2.msra.mxu0 0.0
    %380 = vmatprep.mubr.f32.mxu0 0.0
    %381 = vmatmul.mubr.f32.gmra.mxu0 %v230
    %v382 = vpop.f32.mrf.mxu0
    %v383 = vadd.f32 %v226, %v382
    %v384 = vpop.f32.mrf.mxu0
    %v385 = vadd.f32 %v226, %v384
    %386 = vdwg.mxu0
    %v387 = vtanh.pop %v312
    %v388 = vtanh.pop %v314
    %v389 = vtanh.pop %v383
    %v390 = vtanh.pop %v385
    %v391 = vld [vmem:[%s5] sm:$0x1f]
    %393 = vset.pattern.permute.xlu0 0
    %394 = vperm.xlu0 %393, %v391
    %v395 = vpop.permute.xlu0 %394
    %v397 = vmul.f32 %v395, %v387
    %v398 = vmul.f32 %v395, %v388
    %v399 = vmul.f32 %v395, %v389
    %v400 = vmul.f32 %v395, %v390
    %v401 = vsel %vm232, %v397, 0.0
    %v402 = vrot.slane %v401, 4
    %v403 = vadd.f32 %v401, %v402
    %v404 = vrot.slane %v403, 2
    %v405 = vadd.f32 %v403, %v404
    %v406 = vrot.slane %v405, 1
    %v407 = vadd.f32 %v405, %v406
    %v408 = vsel %vm232, %v398, 0.0
    %v409 = vrot.slane %v408, 4
    %v410 = vadd.f32 %v408, %v409
    %v411 = vrot.slane %v410, 2
    %v412 = vadd.f32 %v410, %v411
    %v413 = vrot.slane %v412, 1
    %v414 = vadd.f32 %v412, %v413
    %v415 = vsel %vm232, %v399, 0.0
    %v416 = vrot.slane %v415, 4
    %v417 = vadd.f32 %v415, %v416
    %v418 = vrot.slane %v417, 2
    %v419 = vadd.f32 %v417, %v418
    %v420 = vrot.slane %v419, 1
    %v421 = vadd.f32 %v419, %v420
    %v422 = vsel %vm232, %v400, 0.0
    %v423 = vrot.slane %v422, 4
    %v424 = vadd.f32 %v422, %v423
    %v425 = vrot.slane %v424, 2
    %v426 = vadd.f32 %v424, %v425
    %v427 = vrot.slane %v426, 1
    %v428 = vadd.f32 %v426, %v427
    %v429 = vld [vmem:[#allocation2] sm:$0x1]
    %431 = vset.pattern.permute.xlu0 0
    %432 = vperm.xlu0 %431, %v429
    %v433 = vpop.permute.xlu0 %432
    %v435 = vlaneseq
    %v436 = vshrl.u32 %v435, 7
    %v437 = vsub.s32 0, %v436
    %v438 = vrot.slane %v433, %v437
    %v439 = vadd.f32 %v407, %v438
    %v440 = vadd.f32 %v414, %v438
    %v441 = vadd.f32 %v421, %v438
    %v442 = vadd.f32 %v428, %v438
    %v443 = vmax.f32 %v439, 0.0
    %v444 = vmax.f32 %v440, 0.0
    %v445 = vmax.f32 %v441, 0.0
    %v446 = vmax.f32 %v442, 0.0
    %v451 = vcombine.low %v443, %v444
    %v452 = vcombine.low %v445, %v446
    %v454 = vunpack.c.l.s4 1966171168
    %v455 = vunpack.c.0.s8 %v454
    %v456 = vlaneseq
    %v457 = vshrl.u32 %v456, 7
    %v458 = vsub.s32 %v455, %v457
    %v459 = vrot.slane %v451, %v458
    %v461 = vunpack.c.l.s4 1966171168
    %v462 = vunpack.c.0.s8 %v461
    %v463 = vlaneseq
    %v464 = vshrl.u32 %v463, 7
    %v465 = vsub.s32 %v462, %v464
    %v466 = vrot.slane %v452, %v465
    %v467 = vcombine.low %v459, %v466
    %v469 = vunpack.c.l.s4 1966171168
    %v470 = vunpack.c.0.s8 %v469
    %v471 = vlaneseq
    %v472 = vshrl.u32 %v471, 7
    %v473 = vsub.s32 %v470, %v472
    %v474 = vrot.slane %v467, %v473
    %v476 = vlaneseq
    %vm477 = vcmp.ge.s32.totalorder %v476, 0
    %vm478 = vcmp.lt.s32.totalorder %v476, 512
    %vm479 = vmand %vm477, %vm478
    %480 = vst.msk [vmem:[#allocation6] sm:$0xf] %vm479, %v474
    // Predicated region
    $region34: #{tpu_custom_call.1} parent=1 // pred_check
      _
    $region35: #{tpu_custom_call.1} parent=1 // pred_check_branch
      %482 = sbr.rel (0) target = $region37
    $region36: #{tpu_custom_call.1} parent=1 // pred_region
      %s484 = ssub.s32 64, 64
      %485 = vsyncadd [#allocation5], %s484
      %s487 = sshll.u32 [#allocation6], 4
      %s488 = int_to_ptr.vmem [resolvable:$true] %s487
      %490 = dma.vmem_to_hbm [thread:$0]  %s488, 64, %s7, [#allocation5]
    $region37: #{tpu_custom_call.1} parent=1 // pred_fallthru
      _
    // Predicated region
    $region38: #{tpu_custom_call.1} parent=1 // pred_check
      _
    $region39: #{tpu_custom_call.1} parent=1 // pred_check_branch
      %492 = sbr.rel (0) target = $region41
    $region40: #{tpu_custom_call.1} parent=1 // pred_region
      %493 = dma.done [#allocation5], 64
    $region41: #{tpu_custom_call.1} parent=1 // pred_fallthru
      _
    %494 = vsyncpa [#allocation4], 1
    %495 = vsyncpa [#allocation5], 1

</llo_original>
